<compile_context>
chip_gen: v5e
topology: v5e:2x2
jax: 0.10.0
libtpu: 0.0.40
codegen_flags: <defaults>
</compile_context>

<pallas_src>
import jax
import jax.numpy as jnp
from jax.experimental import pallas as pl
from jax.experimental.pallas import tpu as pltpu


def _round_up(x, m):
    return ((x + m - 1) // m) * m


def _temporal_mask_kernel(x_ref, o_ref):
    # x_ref: [TN, C, TL] (native dtype)  ->  o_ref: [TN, TL]
    xf = x_ref[...].astype(jnp.float32)        # in-register upcast (free)
    m = jnp.max(xf, axis=1)                    # channel max: sublane reduce (XLU)
    # exact numerically-stable sigmoid: exp on EUP, full-precision divide
    z = jnp.exp(-jnp.abs(m))
    num = jnp.where(m >= 0.0, 1.0, z)
    o_ref[...] = (num / (1.0 + z)).astype(o_ref.dtype)


def temporal_mask(x, *, lane_tile=2048, vmem_block_budget=4 << 20):
    """sigmoid(max(x, axis=1, keepdims=True)) for x: [N, C, L] (PyTorch NCW)."""
    n, c, l = x.shape
    itemsize = jnp.dtype(x.dtype).itemsize

    # ---- L tile: full extent when it fits, else a big multiple of 128 with a
    # ragged tail (a 128-multiple block is legal even when L isn't). ----
    tl = l if l <= lane_tile else _round_up(lane_tile, 128)
    group = min(n, 8)
    if group * c * tl * itemsize > vmem_block_budget and l > 128:
        tl_cap = max(128, (vmem_block_budget // max(group * c * itemsize, 1)) // 128 * 128)
        tl = min(tl, tl_cap)

    # ---- N tile: batch samples per grid step up to the VMEM block budget.
    # Output block is [TN, TL]; TN must be a multiple of 8 or the full N. ----
    tn = max(1, vmem_block_budget // max(c * tl * itemsize, 1))
    if tn < n:
        tn = max(8, (tn // 8) * 8)
    if tn >= n:
        tn = n

    # ---- v7x: prefer >=2 grid steps along a "parallel" axis so both
    # TensorCores share the work (no effect / no cost on v5e / v6e). ----
    if pl.cdiv(n, tn) == 1 and pl.cdiv(l, tl) == 1:
        if n >= 16:
            tn = max(8, _round_up(pl.cdiv(n, 2), 8))
        elif l >= 256:
            tl = _round_up(pl.cdiv(l, 2), 128)

    grid = (pl.cdiv(n, tn), pl.cdiv(l, tl))

    # explicit scoped-VMEM limit: 2x-buffered input + output blocks + headroom,
    # clamped so it always fits v7x's 64 MiB physical VMEM per TensorCore.
    in_block = tn * c * tl * itemsize
    out_block = tn * tl * itemsize
    vmem_limit = int(min(max(3 * (in_block + out_block) + (1 << 20), 16 << 20), 48 << 20))

    out = pl.pallas_call(
        _temporal_mask_kernel,
        out_shape=jax.ShapeDtypeStruct((n, l), x.dtype),
        grid=grid,
        in_specs=[pl.BlockSpec((tn, c, tl), lambda i, j: (i, 0, j))],
        out_specs=pl.BlockSpec((tn, tl), lambda i, j: (i, j)),
        compiler_params=pltpu.CompilerParams(
            dimension_semantics=("parallel", "parallel"),
            vmem_limit_bytes=vmem_limit),
    )(x)
    return out.reshape(n, 1, l)


if __name__ == "__main__":
    key = jax.random.PRNGKey(0)
    k1, k2, k3 = jax.random.split(key, 3)

    # aligned shape, as TemporalMask sees it inside the network: [N, C, L]
    x1 = jax.random.normal(k1, (2, 64, 256), jnp.float32)
    # deliberately unaligned shape to exercise the ragged / full-extent path
    x2 = jax.random.normal(k2, (3, 5, 100), jnp.float32) * 4.0
    # native bf16 path (no wrapper upcast)
    x3 = (jax.random.normal(k3, (2, 16, 128), jnp.float32)).astype(jnp.bfloat16)

    for x, tol in ((x1, 1e-5), (x2, 1e-5), (x3, 1e-2)):
        y = temporal_mask(x)
        jax.block_until_ready(y)
        ref = jax.nn.sigmoid(
            jnp.max(x.astype(jnp.float32), axis=1, keepdims=True)
        ).astype(x.dtype)
        assert y.shape == (x.shape[0], 1, x.shape[2])
        assert y.dtype == x.dtype
        assert bool(jnp.all(jnp.isfinite(y.astype(jnp.float32))))
        err = float(jnp.max(jnp.abs(y.astype(jnp.float32) - ref.astype(jnp.float32))))
        assert err <= tol, err

    print("KERNEL_OK")
</pallas_src>

<mosaic_0001>
module attributes {stable_mosaic.version = 11 : i64} {
  func.func @_temporal_mask_kernel(%arg0: i32, %arg1: i32, %arg2: memref<2x64x128xf32, #tpu.memory_space<vmem>>, %arg3: memref<2x128xf32, #tpu.memory_space<vmem>>) attributes {dimension_semantics = [#tpu.dimension_semantics<parallel>, #tpu.dimension_semantics<parallel>], iteration_bounds = array<i64: 1, 2>, scalar_prefetch = 0 : i64, scratch_operands = 0 : i64, tpu.core_type = #tpu.core_type<tc>, window_params = [{transform_indices = @transform_0, window_bounds = array<i64: 2, 64, 128>}, {transform_indices = @transform_1, window_bounds = array<i64: 2, 128>}]} {
    %c0 = arith.constant 0 : index
    %c0_0 = arith.constant 0 : index
    %c0_1 = arith.constant 0 : index
    %0 = vector.load %arg2[%c0, %c0_0, %c0_1] : memref<2x64x128xf32, #tpu.memory_space<vmem>>, vector<2x64x128xf32>
    %cst = arith.constant dense<0xFF800000> : vector<2x128xf32>
    %1 = vector.multi_reduction <maximumf>, %0, %cst [1] : vector<2x64x128xf32> to vector<2x128xf32>
    %2 = math.absf %1 : vector<2x128xf32>
    %cst_2 = arith.constant 0.000000e+00 : f32
    %3 = vector.broadcast %cst_2 : f32 to vector<2x128xf32>
    %4 = arith.subf %3, %2 : vector<2x128xf32>
    %5 = math.exp %4 : vector<2x128xf32>
    %cst_3 = arith.constant 0.000000e+00 : f32
    %6 = vector.broadcast %cst_3 : f32 to vector<2x128xf32>
    %7 = arith.cmpf oge, %1, %6 : vector<2x128xf32>
    %cst_4 = arith.constant 1.000000e+00 : f32
    %8 = vector.broadcast %cst_4 : f32 to vector<2x128xf32>
    %9 = arith.select %7, %8, %5 : vector<2x128xi1>, vector<2x128xf32>
    %cst_5 = arith.constant 1.000000e+00 : f32
    %10 = vector.broadcast %cst_5 : f32 to vector<2x128xf32>
    %11 = arith.addf %10, %5 : vector<2x128xf32>
    %12 = arith.divf %9, %11 : vector<2x128xf32>
    %c0_6 = arith.constant 0 : index
    %c0_7 = arith.constant 0 : index
    %13 = vector.load %arg3[%c0_6, %c0_7] : memref<2x128xf32, #tpu.memory_space<vmem>>, vector<2x128xf32>
    tpu.vector_store %arg3[%c0_6, %c0_7], %12 {strides = array<i32>} : memref<2x128xf32, #tpu.memory_space<vmem>>, vector<2x128xf32>,
    return
  }
  func.func @transform_0(%arg0: i32, %arg1: i32) -> (i32, i32, i32) {
    %c0_i32 = arith.constant 0 : i32
    %c0_i32_0 = arith.constant 0 : i32
    return %arg0, %c0_i32, %arg1 : i32, i32, i32
  }
  func.func @transform_1(%arg0: i32, %arg1: i32) -> (i32, i32) {
    %c0_i32 = arith.constant 0 : i32
    return %arg0, %arg1 : i32, i32
  }
}

</mosaic_0001>

<llo_original>
// kernel: tpu_custom_call.1
$region0: #{tpu_custom_call.1}
  #allocation0 [shape = 'u32[]', space=smem, size = 0x4, offset = 0x4, fixed_abs, tag = 'smem constant byte address 0x4 - core index']
  #allocation1 [shape = 'u32[72,128]{1,0:T(1,128)}', space=vmem, size = 0x9000, scoped, tag = 'internal scratch']
  %s0 = inlined_call_operand.hbm [shape: f32[2,64,256], index: 0, kind: input, shape index: {}]
  %s1 = inlined_call_operand.hbm [shape: f32[2,256], index: 1, kind: output, shape index: {}]
  %s2 = sld [smem:[#allocation0]]
  $region41: #{tpu_custom_call.1} parent=0
    _
  %s4 = ssub.s32 1, %s2
  %s5 = scalar_select 0, %s4, %s2
  $region1: #{tpu_custom_call.1} parent=0
    #allocation2 [shape = 'u8[131072]{0}', space=vmem, size = 0x20000, scoped, tag = 'input window, operand 0']
    #allocation3 [shape = 's32[2]{0}', space=sflag, size = 0x8, scoped, tag = 'scoped memory for tpu_custom_call.1']
    #allocation4 [shape = 's32[2]{0}', space=sflag, size = 0x8, scoped, tag = 'scoped memory for tpu_custom_call.1']
    #allocation5 [shape = 'u8[2048]{0}', space=vmem, size = 0x800, scoped, tag = 'output window, operand 0']
    %6 = vsyncpa [#allocation3], 0
    %s7 = scalar_lea.sflag [#allocation3], 1
    %8 = vsyncpa %s7, 0
    %9 = vsyncpa [#allocation4], 0
    %s10 = scalar_lea.sflag [#allocation4], 1
    %11 = vsyncpa %s10, 0
    loop: start=0, step=1, limit=4
    $region2: #{tpu_custom_call.1} parent=1 // loop_pre_header
      _
    $region3: #{tpu_custom_call.1} parent=1 // loop_header
      %s13 = sphi 0, %s17
      %p14 = scmp.ge.s32.totalorder %s13, 4
      %s20 = sphi 0, %s32
      %s21 = sphi 0, %s28
      %s22 = sphi 0, %s20
      %s23 = sphi 0, %s21
      %s24 = sphi 0, %s22
      %s25 = sphi 0, %s23
      %s37 = sphi 0, %s39
      %s40 = sphi 0, %s37
      %s41 = sphi 0, %s40
      %s57 = sphi 0, %s41
      %s65 = sphi 0, %s67
      %s68 = sphi 0, %s65
      %s69 = sphi 0, %s68
      %s85 = sphi 0, %s69
    $region4: #{tpu_custom_call.1} parent=1 // loop_header_branch
      %16 = sbr.rel (%p14) target = $region8
    $region5: #{tpu_custom_call.1} parent=1 // loop_body
      %s18 = ssub.s32 %s13, 1
      %s19 = ssub.s32 %s13, 2
      %s26 = sadd.s32 1, %s21
      %p27 = scmp.ge.s32.totalorder %s26, 2
      %s28 = scalar_select %p27, 0, %s26
      %s29 = sadd.s32 1, %s20
      %s30 = scalar_select %p27, %s29, %s20
      %p31 = scmp.ge.s32.totalorder %s30, 1
      %s32 = scalar_select %p31, 0, %s30
      %s33 = ssub.s32 %s20, %s32
      %s34 = ssub.s32 %s21, %s28
      %s35 = sor.u32 %s33, %s34
      %p36 = scmp.eq.s32.totalorder %s35, 0
      %s38 = sadd.s32 %s37, 1
      %s39 = scalar_select %p36, %s37, %s38
      %p42 = pneg %p36
      %p43 = scmp.eq.s32.totalorder %s13, 1
      %p44 = por %p42, %p43
      %p45 = scmp.ne.s32.totalorder %s37, %s40
      %p46 = scmp.eq.s32.totalorder %s13, 0
      %p47 = por %p45, %p46
      %p48 = scmp.ne.s32.totalorder %s37, %s40
      %p49 = scmp.eq.s32.totalorder %s18, 1
      %p50 = por %p48, %p49
      %p51 = scmp.ne.s32.totalorder %s40, %s41
      %p52 = scmp.eq.s32.totalorder %s18, 0
      %p53 = por %p51, %p52
      %p54 = scmp.ne.s32.totalorder %s40, %s41
      %p55 = scmp.eq.s32.totalorder %s19, 1
      %p56 = por %p54, %p55
      %p58 = scmp.ne.s32.totalorder %s41, %s57
      %p59 = scmp.eq.s32.totalorder %s19, 0
      %p60 = por %p58, %p59
      %s61 = ssub.s32 %s20, %s32
      %s62 = ssub.s32 %s21, %s28
      %s63 = sor.u32 %s61, %s62
      %p64 = scmp.eq.s32.totalorder %s63, 0
      %s66 = sadd.s32 %s65, 1
      %s67 = scalar_select %p64, %s65, %s66
      %p70 = pneg %p64
      %p71 = scmp.eq.s32.totalorder %s13, 1
      %p72 = por %p70, %p71
      %p73 = scmp.ne.s32.totalorder %s65, %s68
      %p74 = scmp.eq.s32.totalorder %s13, 0
      %p75 = por %p73, %p74
      %p76 = scmp.ne.s32.totalorder %s65, %s68
      %p77 = scmp.eq.s32.totalorder %s18, 1
      %p78 = por %p76, %p77
      %p79 = scmp.ne.s32.totalorder %s68, %s69
      %p80 = scmp.eq.s32.totalorder %s18, 0
      %p81 = por %p79, %p80
      %p82 = scmp.ne.s32.totalorder %s68, %s69
      %p83 = scmp.eq.s32.totalorder %s19, 1
      %p84 = por %p82, %p83
      %p86 = scmp.ne.s32.totalorder %s69, %s85
      %p87 = scmp.eq.s32.totalorder %s19, 0
      %p88 = por %p86, %p87
      %p89 = scmp.le.s32.totalorder 1, %s13
      %p90 = scmp.lt.s32.totalorder %s13, 3
      %p91 = pnand %p89, %p90
      %p92 = pneg %p91
      // Predicated region
      $region9: #{tpu_custom_call.1} parent=5 // pred_check
        _
      $region10: #{tpu_custom_call.1} parent=5 // pred_check_branch
        %94 = sbr.rel (%p91) target = $region12
      $region11: #{tpu_custom_call.1} parent=5 // pred_region
        %s95 = ssub.s32 %s13, 1
      $region12: #{tpu_custom_call.1} parent=5 // pred_fallthru
        _
      %p96 = scmp.lt.s32.totalorder %s13, 2
      // Predicated region
      $region13: #{tpu_custom_call.1} parent=5 // pred_check
        %p97 = pneg %p96
      $region14: #{tpu_custom_call.1} parent=5 // pred_check_branch
        %99 = sbr.rel (%p97) target = $region16
      $region15: #{tpu_custom_call.1} parent=5 // pred_region
        // Predicated region
        $region17: #{tpu_custom_call.1} parent=15 // pred_check
          %p100 = pneg %p47
        $region18: #{tpu_custom_call.1} parent=15 // pred_check_branch
          %102 = sbr.rel (%p100) target = $region20
        $region19: #{tpu_custom_call.1} parent=15 // pred_region
          %s103 = sand.u32 %s37, 1
          %s104 = scalar_lea.sflag [#allocation3], %s103
          %s105 = sand.u32 %s37, 1
          %s106 = smul.addr %s105, 128
          %s107 = scalar_lea.vmem [#allocation2], %s106
          %s108 = smul.u32 2, %s20
          %110 = vsyncadd %s104, 0
          %s111 = smul.addr %s108, 16
          %s112 = sadd.s32 %s21, %s111
          %s113 = smul.addr %s112, 8
          %s114 = scalar_lea.hbm %s0, %s113
          %s115 = sshll.u32 %s114, 4
          %s116 = int_to_ptr.hbm [resolvable:$true] %s115
          %s117 = sshll.u32 %s107, 4
          %s118 = int_to_ptr.vmem [resolvable:$true] %s117
          %123 = dma.hbm_to_vmem [thread:$0]  %s116, 2048, %s118, %s104, 256, 128, 8
        $region20: #{tpu_custom_call.1} parent=15 // pred_fallthru
          _
      $region16: #{tpu_custom_call.1} parent=5 // pred_fallthru
        _
      %p124 = scmp.le.s32.totalorder 1, %s13
      %p125 = scmp.lt.s32.totalorder %s13, 3
      %p126 = pnand %p124, %p125
      %p127 = pneg %p126
      // Predicated region
      $region21: #{tpu_custom_call.1} parent=5 // pred_check
        _
      $region22: #{tpu_custom_call.1} parent=5 // pred_check_branch
        %129 = sbr.rel (%p126) target = $region24
      $region23: #{tpu_custom_call.1} parent=5 // pred_region
        %s130 = ssub.s32 %s13, 1
        %s131 = sand.u32 %s40, 1
        %s132 = scalar_lea.sflag [#allocation3], %s131
        %s133 = sand.u32 %s40, 1
        %s134 = smul.addr %s133, 128
        %s135 = scalar_lea.vmem [#allocation2], %s134
        // Predicated region
        $region25: #{tpu_custom_call.1} parent=23 // pred_check
          %p136 = pneg %p53
        $region26: #{tpu_custom_call.1} parent=23 // pred_check_branch
          %138 = sbr.rel (%p136) target = $region28
        $region27: #{tpu_custom_call.1} parent=23 // pred_region
          %140 = dma.done %s132, 2048
        $region28: #{tpu_custom_call.1} parent=23 // pred_fallthru
          _
        %s141 = sand.u32 %s40, 1
        %s142 = scalar_lea.sflag [#allocation3], %s141
        %s143 = sand.u32 %s40, 1
        %s144 = smul.addr %s143, 128
        %s145 = scalar_lea.vmem [#allocation2], %s144
        %p146 = pneg %p53
        %p147 = pneg %p50
        %p148 = pneg %p81
        %p149 = pneg %p78
        %s150 = sand.u32 %s68, 1
        %s151 = scalar_lea.sflag [#allocation4], %s150
        %s152 = sand.u32 %s68, 1
        %s153 = smul.addr %s152, 2
        %s154 = scalar_lea.vmem [#allocation5], %s153
        %s155 = smul.u32 2, %s22
        %v156 = vld [vmem:[%s135] sm:$0xff]
        %v157 = vld [vmem:[%s135 + $0x8] sm:$0xff]
        %v158 = vld [vmem:[%s135 + $0x10] sm:$0xff]
        %v159 = vld [vmem:[%s135 + $0x18] sm:$0xff]
        %v160 = vld [vmem:[%s135 + $0x20] sm:$0xff]
        %v161 = vld [vmem:[%s135 + $0x28] sm:$0xff]
        %v162 = vld [vmem:[%s135 + $0x30] sm:$0xff]
        %v163 = vld [vmem:[%s135 + $0x38] sm:$0xff]
        %v164 = vld [vmem:[%s135 + $0x40] sm:$0xff]
        %v165 = vld [vmem:[%s135 + $0x48] sm:$0xff]
        %v166 = vld [vmem:[%s135 + $0x50] sm:$0xff]
        %v167 = vld [vmem:[%s135 + $0x58] sm:$0xff]
        %v168 = vld [vmem:[%s135 + $0x60] sm:$0xff]
        %v169 = vld [vmem:[%s135 + $0x68] sm:$0xff]
        %v170 = vld [vmem:[%s135 + $0x70] sm:$0xff]
        %v171 = vld [vmem:[%s135 + $0x78] sm:$0xff]
        %v172 = vmax.f32 %v156, %v158
        %v173 = vmax.f32 %v157, %v159
        %v174 = vmax.f32 %v172, %v160
        %v175 = vmax.f32 %v173, %v161
        %v176 = vmax.f32 %v174, %v162
        %v177 = vmax.f32 %v175, %v163
        %v178 = vmax.f32 %v176, %v177
        %v179 = vrot.slane %v178, 4
        %v180 = vmax.f32 %v178, %v179
        %v181 = vrot.slane %v180, 2
        %v182 = vmax.f32 %v180, %v181
        %v183 = vrot.slane %v182, 1
        %v184 = vmax.f32 %v182, %v183
        %v185 = vmax.f32 %v164, %v166
        %v186 = vmax.f32 %v165, %v167
        %v187 = vmax.f32 %v185, %v168
        %v188 = vmax.f32 %v186, %v169
        %v189 = vmax.f32 %v187, %v170
        %v190 = vmax.f32 %v188, %v171
        %v191 = vmax.f32 %v189, %v190
        %v192 = vrot.slane %v191, 4
        %v193 = vmax.f32 %v191, %v192
        %v194 = vrot.slane %v193, 2
        %v195 = vmax.f32 %v193, %v194
        %v196 = vrot.slane %v195, 1
        %v197 = vmax.f32 %v195, %v196
        %v198 = vand.u32 2147483647, %v184
        %v199 = vand.u32 2147483647, %v197
        %v200 = vsub.f32 0.0, %v198
        %v201 = vsub.f32 0.0, %v199
        %v202 = vmul.f32 %v200, 1.442695
        %v203 = vpow.pop %v202
        %v204 = vmul.f32 %v201, 1.442695
        %v205 = vpow.pop %v204
        %vm206 = vcmp.ge.f32.partialorder %v184, 0.0
        %vm207 = vcmp.ge.f32.partialorder %v197, 0.0
        %v208 = vsel %vm206, 1.0, %v203
        %v209 = vsel %vm207, 1.0, %v205
        %v210 = vadd.f32 %v203, 1.0
        %v211 = vadd.f32 %v205, 1.0
        %v212 = vrcp.pop %v210
        %v213 = vmul.f32 %v210, %v212
        %v214 = vsub.f32 1.0, %v213
        %v215 = vmul.f32 %v212, %v214
        %v216 = vadd.f32 %v212, %v215
        %vm217 = vweird.f32 %v210
        %vm218 = vweird.f32 %v212
        %vm219 = vmor %vm217, %vm218
        %v220 = vsel %vm219, %v212, %v216
        %v221 = vand.u32 2147483647, %v210
        %vm222 = vcmp.eq.f32.partialorder %v221, 8.507059e+37
        %v223 = vand.u32 %v210, 2147483648
        %v224 = vor.u32 1.1754944e-38, %v223
        %v225 = vsel %vm222, %v224, %v220
        %v226 = vmul.f32 %v208, %v225
        %v227 = vrcp.pop %v211
        %v228 = vmul.f32 %v211, %v227
        %v229 = vsub.f32 1.0, %v228
        %v230 = vmul.f32 %v227, %v229
        %v231 = vadd.f32 %v227, %v230
        %vm232 = vweird.f32 %v211
        %vm233 = vweird.f32 %v227
        %vm234 = vmor %vm232, %vm233
        %v235 = vsel %vm234, %v227, %v231
        %v236 = vand.u32 2147483647, %v211
        %vm237 = vcmp.eq.f32.partialorder %v236, 8.507059e+37
        %v238 = vand.u32 %v211, 2147483648
        %v239 = vor.u32 1.1754944e-38, %v238
        %v240 = vsel %vm237, %v239, %v235
        %v241 = vmul.f32 %v209, %v240
        %vm244 = vcmask 1041409
        %v245 = vsel %vm244, %v241, %v226
        %247 = vst [vmem:[%s154] sm:$0x3] %v245
        %s248 = sand.u32 %s68, 1
        %s249 = scalar_lea.sflag [#allocation4], %s248
        %s250 = sand.u32 %s68, 1
        %s251 = smul.addr %s250, 2
        %s252 = scalar_lea.vmem [#allocation5], %s251
        // Predicated region
        $region29: #{tpu_custom_call.1} parent=23 // pred_check
          %p253 = pneg %p78
        $region30: #{tpu_custom_call.1} parent=23 // pred_check_branch
          %255 = sbr.rel (%p253) target = $region32
        $region31: #{tpu_custom_call.1} parent=23 // pred_region
          %257 = vsyncadd %s249, 0
          %s258 = smul.addr %s22, 2
          %s259 = sadd.s32 %s23, %s258
          %s260 = smul.addr %s259, 2
          %s261 = scalar_lea.hbm %s1, %s260
          %s263 = sshll.u32 %s252, 4
          %s264 = int_to_ptr.vmem [resolvable:$true] %s263
          %s265 = sshll.u32 %s261, 4
          %s266 = int_to_ptr.hbm [resolvable:$true] %s265
          %268 = dma.vmem_to_hbm [thread:$0]  %s264, 32, %s266, %s249
        $region32: #{tpu_custom_call.1} parent=23 // pred_fallthru
          _
      $region24: #{tpu_custom_call.1} parent=5 // pred_fallthru
        _
      %p269 = scmp.le.s32.totalorder 2, %s13
      // Predicated region
      $region33: #{tpu_custom_call.1} parent=5 // pred_check
        %p270 = pneg %p269
      $region34: #{tpu_custom_call.1} parent=5 // pred_check_branch
        %272 = sbr.rel (%p270) target = $region36
      $region35: #{tpu_custom_call.1} parent=5 // pred_region
        %s273 = ssub.s32 %s13, 2
        // Predicated region
        $region37: #{tpu_custom_call.1} parent=35 // pred_check
          %p274 = pneg %p84
        $region38: #{tpu_custom_call.1} parent=35 // pred_check_branch
          %276 = sbr.rel (%p274) target = $region40
        $region39: #{tpu_custom_call.1} parent=35 // pred_region
          %s277 = sand.u32 %s69, 1
          %s278 = scalar_lea.sflag [#allocation4], %s277
          %s279 = sand.u32 %s69, 1
          %s280 = smul.addr %s279, 2
          %s281 = scalar_lea.vmem [#allocation5], %s280
          %283 = dma.done %s278, 32
        $region40: #{tpu_custom_call.1} parent=35 // pred_fallthru
          _
      $region36: #{tpu_custom_call.1} parent=5 // pred_fallthru
        _
    $region6: #{tpu_custom_call.1} parent=1 // loop_footer
      %s17 = sadd.s32 1, %s13
    $region7: #{tpu_custom_call.1} parent=1 // loop_footer_branch
      %12 = sbr.rel target = $region3
    $region8: #{tpu_custom_call.1} parent=1 // loop_exit
      _
    %284 = vsyncpa [#allocation3], 1
    %s285 = scalar_lea.sflag [#allocation3], 1
    %286 = vsyncpa %s285, 1
    %287 = vsyncpa [#allocation4], 1
    %s288 = scalar_lea.sflag [#allocation4], 1
    %289 = vsyncpa %s288, 1

</llo_original>
